<compile_context>
chip_gen: v7x
topology: tpu7x:2x2x1
jax: 0.10.0
libtpu: 0.0.40
codegen_flags: <defaults>
</compile_context>

<pallas_src>
import functools

import jax
import jax.numpy as jnp
from jax.experimental import pallas as pl
from jax.experimental.pallas import tpu as pltpu


def _std_kernel(x_ref, o_ref, *, stride: int):
    # x_ref: (GBLK*stride, D) dense 2D input tile
    # o_ref: (GBLK, D) dense 2D output tile
    gblk = o_ref.shape[0]
    inv = jnp.float32(1.0 / stride)

    def row(k):
        # k-th member of every group in this block: rows k, k+stride, k+2*stride, ...
        return x_ref[pl.ds(k, gblk, stride=stride), :].astype(jnp.float32)

    # Pass 1: group sums via unrolled VPU adds (stride is small & static).
    s = row(0)
    for k in range(1, stride):
        s = s + row(k)
    mean = s * inv

    # Pass 2: sum of squared deviations (two-pass form; avoids E[x^2]-E[x]^2 cancellation).
    d = row(0) - mean
    ssq = d * d
    for k in range(1, stride):
        d = row(k) - mean
        ssq = ssq + d * d

    # Population std (unbiased=False / ddof=0), matching the PyTorch module.
    o_ref[...] = jnp.sqrt(ssq * inv).astype(o_ref.dtype)


def std_pallas(feature: jax.Array, stride: int = 10,
               target_tile_bytes: int = 6 << 20) -> jax.Array:
    """Pallas equivalent of Std.forward: population std over groups of `stride` rows."""
    B, L, D = feature.shape
    assert L % stride == 0, "L must be divisible by stride"
    G = L // stride
    N = B * G  # total number of groups

    # Groups per grid step: ~target_tile_bytes of f32 input per step, multiple of 8
    # so both the (GBLK*stride, D) input block and the (GBLK, D) output block are
    # sublane-aligned. (~6 MiB input tile => ~14 MiB double-buffered VMEM total.)
    gblk = max(1, target_tile_bytes // (stride * D * 4))
    gblk = min(gblk, N)
    gblk = max(8, (gblk // 8) * 8)

    n_pad = pl.cdiv(N, gblk) * gblk
    num_blocks = n_pad // gblk

    x2d = feature.reshape(N * stride, D)
    if n_pad != N:
        # Zero-pad extra groups; their outputs are sliced away below.
        x2d = jnp.pad(x2d, ((0, (n_pad - N) * stride), (0, 0)))

    out = pl.pallas_call(
        functools.partial(_std_kernel, stride=stride),
        out_shape=jax.ShapeDtypeStruct((n_pad, D), feature.dtype),
        grid=(num_blocks,),
        in_specs=[pl.BlockSpec((gblk * stride, D), lambda i: (i, 0))],
        out_specs=pl.BlockSpec((gblk, D), lambda i: (i, 0)),
        compiler_params=pltpu.CompilerParams(
            dimension_semantics=("parallel",),
            vmem_limit_bytes=32 << 20,
        ),
    )(x2d)

    if n_pad != N:
        out = out[:N]
    return out.reshape(B, G, D)


if __name__ == "__main__":
    key = jax.random.PRNGKey(0)
    B, L, D = 2, 80, 128  # L divisible by stride=10
    stride = 10
    feature = jax.random.normal(key, (B, L, D), dtype=jnp.float32)

    result = std_pallas(feature, stride=stride)
    jax.block_until_ready(result)

    # Sanity check vs plain-JAX reference (population std, ddof=0 == unbiased=False).
    ref = jnp.std(feature.reshape(-1, stride, D), axis=-2).reshape(B, L // stride, D)
    assert result.shape == (B, L // stride, D)
    assert jnp.allclose(result, ref, atol=1e-5, rtol=1e-5)

    print("KERNEL_OK")
</pallas_src>

<mosaic_0001>
module attributes {stable_mosaic.version = 11 : i64} {
  func.func @_std_kernel(%arg0: i32, %arg1: memref<160x128xf32, #tpu.memory_space<vmem>>, %arg2: memref<16x128xf32, #tpu.memory_space<vmem>>) attributes {dimension_semantics = [#tpu.dimension_semantics<parallel>], iteration_bounds = array<i64: 1>, scalar_prefetch = 0 : i64, scratch_operands = 0 : i64, tpu.core_type = #tpu.core_type<tc>, window_params = [{transform_indices = @transform_0, window_bounds = array<i64: 160, 128>}, {transform_indices = @transform_1, window_bounds = array<i64: 16, 128>}]} {
    %c0 = arith.constant 0 : index
    %c0_0 = arith.constant 0 : index
    %0 = tpu.strided_load %arg1[%c0, %c0_0] {strides = array<i32: 10, 1>} : memref<160x128xf32, #tpu.memory_space<vmem>>, vector<16x128xf32>
    %c1 = arith.constant 1 : index
    %c0_1 = arith.constant 0 : index
    %1 = tpu.strided_load %arg1[%c1, %c0_1] {strides = array<i32: 10, 1>} : memref<160x128xf32, #tpu.memory_space<vmem>>, vector<16x128xf32>
    %2 = arith.addf %0, %1 : vector<16x128xf32>
    %c2 = arith.constant 2 : index
    %c0_2 = arith.constant 0 : index
    %3 = tpu.strided_load %arg1[%c2, %c0_2] {strides = array<i32: 10, 1>} : memref<160x128xf32, #tpu.memory_space<vmem>>, vector<16x128xf32>
    %4 = arith.addf %2, %3 : vector<16x128xf32>
    %c3 = arith.constant 3 : index
    %c0_3 = arith.constant 0 : index
    %5 = tpu.strided_load %arg1[%c3, %c0_3] {strides = array<i32: 10, 1>} : memref<160x128xf32, #tpu.memory_space<vmem>>, vector<16x128xf32>
    %6 = arith.addf %4, %5 : vector<16x128xf32>
    %c4 = arith.constant 4 : index
    %c0_4 = arith.constant 0 : index
    %7 = tpu.strided_load %arg1[%c4, %c0_4] {strides = array<i32: 10, 1>} : memref<160x128xf32, #tpu.memory_space<vmem>>, vector<16x128xf32>
    %8 = arith.addf %6, %7 : vector<16x128xf32>
    %c5 = arith.constant 5 : index
    %c0_5 = arith.constant 0 : index
    %9 = tpu.strided_load %arg1[%c5, %c0_5] {strides = array<i32: 10, 1>} : memref<160x128xf32, #tpu.memory_space<vmem>>, vector<16x128xf32>
    %10 = arith.addf %8, %9 : vector<16x128xf32>
    %c6 = arith.constant 6 : index
    %c0_6 = arith.constant 0 : index
    %11 = tpu.strided_load %arg1[%c6, %c0_6] {strides = array<i32: 10, 1>} : memref<160x128xf32, #tpu.memory_space<vmem>>, vector<16x128xf32>
    %12 = arith.addf %10, %11 : vector<16x128xf32>
    %c7 = arith.constant 7 : index
    %c0_7 = arith.constant 0 : index
    %13 = tpu.strided_load %arg1[%c7, %c0_7] {strides = array<i32: 10, 1>} : memref<160x128xf32, #tpu.memory_space<vmem>>, vector<16x128xf32>
    %14 = arith.addf %12, %13 : vector<16x128xf32>
    %c8 = arith.constant 8 : index
    %c0_8 = arith.constant 0 : index
    %15 = tpu.strided_load %arg1[%c8, %c0_8] {strides = array<i32: 10, 1>} : memref<160x128xf32, #tpu.memory_space<vmem>>, vector<16x128xf32>
    %16 = arith.addf %14, %15 : vector<16x128xf32>
    %c9 = arith.constant 9 : index
    %c0_9 = arith.constant 0 : index
    %17 = tpu.strided_load %arg1[%c9, %c0_9] {strides = array<i32: 10, 1>} : memref<160x128xf32, #tpu.memory_space<vmem>>, vector<16x128xf32>
    %18 = arith.addf %16, %17 : vector<16x128xf32>
    %cst = arith.constant 1.000000e-01 : f32
    %19 = vector.broadcast %cst : f32 to vector<16x128xf32>
    %20 = arith.mulf %18, %19 : vector<16x128xf32>
    %c0_10 = arith.constant 0 : index
    %c0_11 = arith.constant 0 : index
    %21 = tpu.strided_load %arg1[%c0_10, %c0_11] {strides = array<i32: 10, 1>} : memref<160x128xf32, #tpu.memory_space<vmem>>, vector<16x128xf32>
    %22 = arith.subf %21, %20 : vector<16x128xf32>
    %23 = arith.mulf %22, %22 : vector<16x128xf32>
    %c1_12 = arith.constant 1 : index
    %c0_13 = arith.constant 0 : index
    %24 = tpu.strided_load %arg1[%c1_12, %c0_13] {strides = array<i32: 10, 1>} : memref<160x128xf32, #tpu.memory_space<vmem>>, vector<16x128xf32>
    %25 = arith.subf %24, %20 : vector<16x128xf32>
    %26 = arith.mulf %25, %25 : vector<16x128xf32>
    %27 = arith.addf %23, %26 : vector<16x128xf32>
    %c2_14 = arith.constant 2 : index
    %c0_15 = arith.constant 0 : index
    %28 = tpu.strided_load %arg1[%c2_14, %c0_15] {strides = array<i32: 10, 1>} : memref<160x128xf32, #tpu.memory_space<vmem>>, vector<16x128xf32>
    %29 = arith.subf %28, %20 : vector<16x128xf32>
    %30 = arith.mulf %29, %29 : vector<16x128xf32>
    %31 = arith.addf %27, %30 : vector<16x128xf32>
    %c3_16 = arith.constant 3 : index
    %c0_17 = arith.constant 0 : index
    %32 = tpu.strided_load %arg1[%c3_16, %c0_17] {strides = array<i32: 10, 1>} : memref<160x128xf32, #tpu.memory_space<vmem>>, vector<16x128xf32>
    %33 = arith.subf %32, %20 : vector<16x128xf32>
    %34 = arith.mulf %33, %33 : vector<16x128xf32>
    %35 = arith.addf %31, %34 : vector<16x128xf32>
    %c4_18 = arith.constant 4 : index
    %c0_19 = arith.constant 0 : index
    %36 = tpu.strided_load %arg1[%c4_18, %c0_19] {strides = array<i32: 10, 1>} : memref<160x128xf32, #tpu.memory_space<vmem>>, vector<16x128xf32>
    %37 = arith.subf %36, %20 : vector<16x128xf32>
    %38 = arith.mulf %37, %37 : vector<16x128xf32>
    %39 = arith.addf %35, %38 : vector<16x128xf32>
    %c5_20 = arith.constant 5 : index
    %c0_21 = arith.constant 0 : index
    %40 = tpu.strided_load %arg1[%c5_20, %c0_21] {strides = array<i32: 10, 1>} : memref<160x128xf32, #tpu.memory_space<vmem>>, vector<16x128xf32>
    %41 = arith.subf %40, %20 : vector<16x128xf32>
    %42 = arith.mulf %41, %41 : vector<16x128xf32>
    %43 = arith.addf %39, %42 : vector<16x128xf32>
    %c6_22 = arith.constant 6 : index
    %c0_23 = arith.constant 0 : index
    %44 = tpu.strided_load %arg1[%c6_22, %c0_23] {strides = array<i32: 10, 1>} : memref<160x128xf32, #tpu.memory_space<vmem>>, vector<16x128xf32>
    %45 = arith.subf %44, %20 : vector<16x128xf32>
    %46 = arith.mulf %45, %45 : vector<16x128xf32>
    %47 = arith.addf %43, %46 : vector<16x128xf32>
    %c7_24 = arith.constant 7 : index
    %c0_25 = arith.constant 0 : index
    %48 = tpu.strided_load %arg1[%c7_24, %c0_25] {strides = array<i32: 10, 1>} : memref<160x128xf32, #tpu.memory_space<vmem>>, vector<16x128xf32>
    %49 = arith.subf %48, %20 : vector<16x128xf32>
    %50 = arith.mulf %49, %49 : vector<16x128xf32>
    %51 = arith.addf %47, %50 : vector<16x128xf32>
    %c8_26 = arith.constant 8 : index
    %c0_27 = arith.constant 0 : index
    %52 = tpu.strided_load %arg1[%c8_26, %c0_27] {strides = array<i32: 10, 1>} : memref<160x128xf32, #tpu.memory_space<vmem>>, vector<16x128xf32>
    %53 = arith.subf %52, %20 : vector<16x128xf32>
    %54 = arith.mulf %53, %53 : vector<16x128xf32>
    %55 = arith.addf %51, %54 : vector<16x128xf32>
    %c9_28 = arith.constant 9 : index
    %c0_29 = arith.constant 0 : index
    %56 = tpu.strided_load %arg1[%c9_28, %c0_29] {strides = array<i32: 10, 1>} : memref<160x128xf32, #tpu.memory_space<vmem>>, vector<16x128xf32>
    %57 = arith.subf %56, %20 : vector<16x128xf32>
    %58 = arith.mulf %57, %57 : vector<16x128xf32>
    %59 = arith.addf %55, %58 : vector<16x128xf32>
    %cst_30 = arith.constant 1.000000e-01 : f32
    %60 = vector.broadcast %cst_30 : f32 to vector<16x128xf32>
    %61 = arith.mulf %59, %60 : vector<16x128xf32>
    %62 = math.sqrt %61 : vector<16x128xf32>
    %c0_31 = arith.constant 0 : index
    %c0_32 = arith.constant 0 : index
    %63 = vector.load %arg2[%c0_31, %c0_32] : memref<16x128xf32, #tpu.memory_space<vmem>>, vector<16x128xf32>
    tpu.vector_store %arg2[%c0_31, %c0_32], %62 {strides = array<i32>} : memref<16x128xf32, #tpu.memory_space<vmem>>, vector<16x128xf32>,
    return
  }
  func.func @transform_0(%arg0: i32) -> (i32, i32) {
    %c0_i32 = arith.constant 0 : i32
    %c0_i32_0 = arith.constant 0 : i32
    return %arg0, %c0_i32 : i32, i32
  }
  func.func @transform_1(%arg0: i32) -> (i32, i32) {
    %c0_i32 = arith.constant 0 : i32
    %c0_i32_0 = arith.constant 0 : i32
    return %arg0, %c0_i32 : i32, i32
  }
}

</mosaic_0001>

<llo_original>
// kernel: tpu_custom_call.1
$region0: #{tpu_custom_call.1}
  #allocation0 [shape = 'u32[]', space=smem, size = 0x4, offset = 0x4, fixed_abs, tag = 'smem constant byte address 0x4 - core index']
  #allocation1 [shape = 'u32[144,128]{1,0:T(1,128)}', space=vmem, size = 0x12000, scoped, tag = 'internal scratch']
  %s0 = inlined_call_operand.hbm [shape: f32[160,128], index: 0, kind: input, shape index: {}]
  %s1 = inlined_call_operand.hbm [shape: f32[16,128], index: 1, kind: output, shape index: {}]
  %s2 = sld [smem:[#allocation0]]
  $region18: #{tpu_custom_call.1} parent=0
    _
  %s4 = ssub.s32 1, %s2
  %s5 = scalar_select 0, %s4, %s2
  $region1: #{tpu_custom_call.1} parent=0
    #allocation2 [shape = 'u8[81920]{0}', space=vmem, size = 0x14000, scoped, tag = 'input window, operand 0, single buffered']
    #allocation3 [shape = 's32[1]{0}', space=sflag, size = 0x4, scoped, tag = 'scoped memory for tpu_custom_call.1']
    #allocation4 [shape = 's32[1]{0}', space=sflag, size = 0x4, scoped, tag = 'scoped memory for tpu_custom_call.1']
    #allocation5 [shape = 'u8[8192]{0}', space=vmem, size = 0x2000, scoped, tag = 'output window, operand 0, single buffered']
    %6 = vsyncpa [#allocation3], 0
    %7 = vsyncpa [#allocation4], 0
    // Predicated region
    $region2: #{tpu_custom_call.1} parent=1 // pred_check
      _
    $region3: #{tpu_custom_call.1} parent=1 // pred_check_branch
      %9 = sbr.rel (0) target = $region5
    $region4: #{tpu_custom_call.1} parent=1 // pred_region
      %s11 = ssub.s32 2560, 2560
      %12 = vsyncadd [#allocation3], %s11
      %s13 = sshll.u32 [#allocation2], 4
      %s14 = int_to_ptr.vmem [resolvable:$true] %s13
      %19 = dma.hbm_to_vmem [thread:$0]  %s0, 2560, %s14, [#allocation3], 128, 128, 8
    $region5: #{tpu_custom_call.1} parent=1 // pred_fallthru
      _
    // Predicated region
    $region6: #{tpu_custom_call.1} parent=1 // pred_check
      _
    $region7: #{tpu_custom_call.1} parent=1 // pred_check_branch
      %21 = sbr.rel (0) target = $region9
    $region8: #{tpu_custom_call.1} parent=1 // pred_region
      %22 = dma.done [#allocation3], 2560
    $region9: #{tpu_custom_call.1} parent=1 // pred_fallthru
      _
    %v23 = vld [vmem:[#allocation2] ss:$10 sm:$0xff]
    %s24 = scalar_lea.vmem [#allocation2], 80
    %v25 = vld [vmem:[%s24] ss:$10 sm:$0xff]
    %s26 = scalar_lea.vmem [#allocation2], 1
    %v27 = vld [vmem:[%s26] ss:$10 sm:$0xff]
    %s28 = scalar_lea.vmem [#allocation2], 81
    %v29 = vld [vmem:[%s28] ss:$10 sm:$0xff]
    %v30 = vadd.f32 %v23, %v27
    %v31 = vadd.f32 %v25, %v29
    %s32 = scalar_lea.vmem [#allocation2], 2
    %v33 = vld [vmem:[%s32] ss:$10 sm:$0xff]
    %s34 = scalar_lea.vmem [#allocation2], 82
    %v35 = vld [vmem:[%s34] ss:$10 sm:$0xff]
    %v36 = vadd.f32 %v30, %v33
    %v37 = vadd.f32 %v31, %v35
    %s38 = scalar_lea.vmem [#allocation2], 3
    %v39 = vld [vmem:[%s38] ss:$10 sm:$0xff]
    %s40 = scalar_lea.vmem [#allocation2], 83
    %v41 = vld [vmem:[%s40] ss:$10 sm:$0xff]
    %v42 = vadd.f32 %v36, %v39
    %v43 = vadd.f32 %v37, %v41
    %s44 = scalar_lea.vmem [#allocation2], 4
    %v45 = vld [vmem:[%s44] ss:$10 sm:$0xff]
    %s46 = scalar_lea.vmem [#allocation2], 84
    %v47 = vld [vmem:[%s46] ss:$10 sm:$0xff]
    %v48 = vadd.f32 %v42, %v45
    %v49 = vadd.f32 %v43, %v47
    %s50 = scalar_lea.vmem [#allocation2], 5
    %v51 = vld [vmem:[%s50] ss:$10 sm:$0xff]
    %s52 = scalar_lea.vmem [#allocation2], 85
    %v53 = vld [vmem:[%s52] ss:$10 sm:$0xff]
    %v54 = vadd.f32 %v48, %v51
    %v55 = vadd.f32 %v49, %v53
    %s56 = scalar_lea.vmem [#allocation2], 6
    %v57 = vld [vmem:[%s56] ss:$10 sm:$0xff]
    %s58 = scalar_lea.vmem [#allocation2], 86
    %v59 = vld [vmem:[%s58] ss:$10 sm:$0xff]
    %v60 = vadd.f32 %v54, %v57
    %v61 = vadd.f32 %v55, %v59
    %s62 = scalar_lea.vmem [#allocation2], 7
    %v63 = vld [vmem:[%s62] ss:$10 sm:$0xff]
    %s64 = scalar_lea.vmem [#allocation2], 87
    %v65 = vld [vmem:[%s64] ss:$10 sm:$0xff]
    %v66 = vadd.f32 %v60, %v63
    %v67 = vadd.f32 %v61, %v65
    %s68 = scalar_lea.vmem [#allocation2], 8
    %v69 = vld [vmem:[%s68] ss:$10 sm:$0xff]
    %s70 = scalar_lea.vmem [#allocation2], 88
    %v71 = vld [vmem:[%s70] ss:$10 sm:$0xff]
    %v72 = vadd.f32 %v66, %v69
    %v73 = vadd.f32 %v67, %v71
    %s74 = scalar_lea.vmem [#allocation2], 9
    %v75 = vld [vmem:[%s74] ss:$10 sm:$0xff]
    %s76 = scalar_lea.vmem [#allocation2], 89
    %v77 = vld [vmem:[%s76] ss:$10 sm:$0xff]
    %v78 = vadd.f32 %v72, %v75
    %v79 = vadd.f32 %v73, %v77
    %v80 = vmul.f32 %v78, 0.1
    %v81 = vmul.f32 %v79, 0.1
    %v82 = vsub.f32 %v23, %v80
    %v83 = vsub.f32 %v25, %v81
    %v84 = vmul.f32 %v82, %v82
    %v85 = vmul.f32 %v83, %v83
    %v86 = vsub.f32 %v27, %v80
    %v87 = vsub.f32 %v29, %v81
    %v88 = vmul.f32 %v86, %v86
    %v89 = vmul.f32 %v87, %v87
    %v90 = vadd.f32 %v84, %v88
    %v91 = vadd.f32 %v85, %v89
    %v92 = vsub.f32 %v33, %v80
    %v93 = vsub.f32 %v35, %v81
    %v94 = vmul.f32 %v92, %v92
    %v95 = vmul.f32 %v93, %v93
    %v96 = vadd.f32 %v90, %v94
    %v97 = vadd.f32 %v91, %v95
    %v98 = vsub.f32 %v39, %v80
    %v99 = vsub.f32 %v41, %v81
    %v100 = vmul.f32 %v98, %v98
    %v101 = vmul.f32 %v99, %v99
    %v102 = vadd.f32 %v96, %v100
    %v103 = vadd.f32 %v97, %v101
    %v104 = vsub.f32 %v45, %v80
    %v105 = vsub.f32 %v47, %v81
    %v106 = vmul.f32 %v104, %v104
    %v107 = vmul.f32 %v105, %v105
    %v108 = vadd.f32 %v102, %v106
    %v109 = vadd.f32 %v103, %v107
    %v110 = vsub.f32 %v51, %v80
    %v111 = vsub.f32 %v53, %v81
    %v112 = vmul.f32 %v110, %v110
    %v113 = vmul.f32 %v111, %v111
    %v114 = vadd.f32 %v108, %v112
    %v115 = vadd.f32 %v109, %v113
    %v116 = vsub.f32 %v57, %v80
    %v117 = vsub.f32 %v59, %v81
    %v118 = vmul.f32 %v116, %v116
    %v119 = vmul.f32 %v117, %v117
    %v120 = vadd.f32 %v114, %v118
    %v121 = vadd.f32 %v115, %v119
    %v122 = vsub.f32 %v63, %v80
    %v123 = vsub.f32 %v65, %v81
    %v124 = vmul.f32 %v122, %v122
    %v125 = vmul.f32 %v123, %v123
    %v126 = vadd.f32 %v120, %v124
    %v127 = vadd.f32 %v121, %v125
    %v128 = vsub.f32 %v69, %v80
    %v129 = vsub.f32 %v71, %v81
    %v130 = vmul.f32 %v128, %v128
    %v131 = vmul.f32 %v129, %v129
    %v132 = vadd.f32 %v126, %v130
    %v133 = vadd.f32 %v127, %v131
    %v134 = vsub.f32 %v75, %v80
    %v135 = vsub.f32 %v77, %v81
    %v136 = vmul.f32 %v134, %v134
    %v137 = vmul.f32 %v135, %v135
    %v138 = vadd.f32 %v132, %v136
    %v139 = vadd.f32 %v133, %v137
    %v140 = vmul.f32 %v138, 0.1
    %v141 = vmul.f32 %v139, 0.1
    %v142 = vrsqrt.pop %v140
    %v143 = vmul.f32 %v140, %v142
    %vm144 = vcmp.eq.f32.partialorder %v140, inf
    %v145 = vsel %vm144, %v140, %v143
    %vm146 = vcmp.eq.f32.partialorder %v140, 0.0
    %v147 = vand.u32 %v140, 2147483648
    %v148 = vsel %vm146, %v147, %v145
    %v149 = vrsqrt.pop %v141
    %v150 = vmul.f32 %v141, %v149
    %vm151 = vcmp.eq.f32.partialorder %v141, inf
    %v152 = vsel %vm151, %v141, %v150
    %vm153 = vcmp.eq.f32.partialorder %v141, 0.0
    %v154 = vand.u32 %v141, 2147483648
    %v155 = vsel %vm153, %v154, %v152
    %156 = vst [vmem:[#allocation5] sm:$0xff] %v148
    %157 = vst [vmem:[#allocation5 + $0x8] sm:$0xff] %v155
    // Predicated region
    $region10: #{tpu_custom_call.1} parent=1 // pred_check
      _
    $region11: #{tpu_custom_call.1} parent=1 // pred_check_branch
      %159 = sbr.rel (0) target = $region13
    $region12: #{tpu_custom_call.1} parent=1 // pred_region
      %s161 = ssub.s32 256, 256
      %162 = vsyncadd [#allocation4], %s161
      %s163 = sshll.u32 [#allocation5], 4
      %s164 = int_to_ptr.vmem [resolvable:$true] %s163
      %169 = dma.vmem_to_hbm [thread:$0]  %s164, 256, %s1, [#allocation4], 128, 128, 8
    $region13: #{tpu_custom_call.1} parent=1 // pred_fallthru
      _
    // Predicated region
    $region14: #{tpu_custom_call.1} parent=1 // pred_check
      _
    $region15: #{tpu_custom_call.1} parent=1 // pred_check_branch
      %171 = sbr.rel (0) target = $region17
    $region16: #{tpu_custom_call.1} parent=1 // pred_region
      %172 = dma.done [#allocation4], 256
    $region17: #{tpu_custom_call.1} parent=1 // pred_fallthru
      _
    %173 = vsyncpa [#allocation3], 1
    %174 = vsyncpa [#allocation4], 1

</llo_original>
